<compile_context>
chip_gen: v7x
topology: tpu7x:2x2x1
jax: 0.10.0
libtpu: 0.0.40
codegen_flags: <defaults>
</compile_context>

<pallas_src>
import functools

import jax
import jax.numpy as jnp
from jax.experimental import pallas as pl
from jax.experimental.pallas import tpu as pltpu


def _cdiv(a, b):
    return -(-a // b)


def _vmem_capacity_bytes():
    """Trace-time VMEM capacity query with a conservative (v7x-sized) fallback."""
    try:
        return int(pltpu.get_tpu_info().vmem_capacity_bytes)
    except Exception:
        return 64 * 1024 * 1024


def _bce_kernel(p_ref, t_ref, o_ref, *, n_chunks):
    """One grid step = one (TR, TM) tile of the flat (N*C_pad, M_pad) view.

    p_ref, t_ref: VMEM (TR, TM) blocks of predictions / targets (TM = n_chunks * 128).
    o_ref:        VMEM (TR, 128) float32 partial-sum block, resident across the
                  innermost (reduction) grid axis.
    """
    # Output block stays resident across the inner lane-tile axis -> init at step 0.
    @pl.when(pl.program_id(2) == 0)
    def _():
        o_ref[...] = jnp.zeros_like(o_ref)

    def chunk_bce(j):
        sl = pl.ds(j * 128, 128)
        p = p_ref[:, sl].astype(jnp.float32)
        t = t_ref[:, sl].astype(jnp.float32)
        # Match torch.nn.functional.binary_cross_entropy: clamp log terms at -100.
        log_p = jnp.maximum(jnp.log(p), -100.0)
        log_1mp = jnp.maximum(jnp.log(1.0 - p), -100.0)
        # -(t*log_p + (1-t)*log_1mp) == t*(log_1mp - log_p) - log_1mp
        return t * (log_1mp - log_p) - log_1mp

    # Two interleaved (TR, 128) accumulators for a little ILP; live values stay ~2 vreg
    # columns wide instead of materializing the whole (TR, TM) bce tensor.
    acc0 = jnp.zeros(o_ref.shape, jnp.float32)
    acc1 = jnp.zeros(o_ref.shape, jnp.float32)
    for j in range(n_chunks):
        if j & 1:
            acc1 = acc1 + chunk_bce(j)
        else:
            acc0 = acc0 + chunk_bce(j)

    o_ref[...] += acc0 + acc1


def bce_loss_weight(prey, target, weight):
    """prey, target: (N, C, H, W) with prey in (0,1); weight: (C,).

    Returns sum_c weight[c] * mean_{N,H,W}(BCE(prey[:,c], target[:,c])),
    identical to the PyTorch BCELoss_weight module.
    """
    N, C, H, W = prey.shape
    M = H * W
    R = N * C

    # Free reshape: NCHW memory order == (N*C, H*W). No transpose / HBM copy.
    p = prey.reshape(R, M)
    t = target.reshape(R, M)

    itemsize = jnp.dtype(prey.dtype).itemsize
    sub_align = 16 if itemsize == 2 else 8  # bf16 packs 2 rows / sublane

    # Generation-dependent tile caps & scoped-VMEM limit.
    vmem_cap = _vmem_capacity_bytes()
    if vmem_cap >= 96 * 1024 * 1024:       # v5e / v6e: 128 MiB physical VMEM
        tr_cap, tm_cap = 512, 4096
        vmem_limit = 64 * 1024 * 1024
    else:                                  # v7x: 64 MiB per TensorCore
        tr_cap, tm_cap = 256, 4096
        vmem_limit = 48 * 1024 * 1024

    # Lane (M) tiling: pad to a multiple of 128, minimum grid steps with minimal waste.
    m_lanes = _cdiv(M, 128)
    n_lane_tiles = max(1, _cdiv(m_lanes * 128, tm_cap))
    tm = 128 * _cdiv(m_lanes, n_lane_tiles)
    M_pad = n_lane_tiles * tm

    # Row (N*C) tiling: pad to the sublane alignment.
    r_rows = _cdiv(R, sub_align)
    n_row_tiles = max(1, _cdiv(r_rows * sub_align, tr_cap))
    tr = sub_align * _cdiv(r_rows, n_row_tiles)
    R_pad = n_row_tiles * tr

    # v7x megacore: if only one row tile, split the lane axis into 2 parallel halves
    # (independent accumulator columns) so both TensorCores get work. Harmless elsewhere.
    mo = 2 if (n_row_tiles == 1 and n_lane_tiles % 2 == 0 and n_lane_tiles >= 2) else 1
    mi = n_lane_tiles // mo

    # Padded elements use (p=1, t=1): bce = 1*(max(log 0,-100) - log 1) - max(log 0,-100)
    # = -100 + 100 = 0 exactly, so they contribute nothing to the sums.
    if (R_pad, M_pad) != (R, M):
        p = jnp.pad(p, ((0, R_pad - R), (0, M_pad - M)), constant_values=1)
        t = jnp.pad(t, ((0, R_pad - R), (0, M_pad - M)), constant_values=1)

    n_chunks = tm // 128
    kernel = functools.partial(_bce_kernel, n_chunks=n_chunks)

    grid = (mo, n_row_tiles, mi)  # reduction (inner lane-tile) axis last

    cost = pl.CostEstimate(
        flops=5 * R_pad * M_pad,
        transcendentals=2 * R_pad * M_pad,
        bytes_accessed=2 * R_pad * M_pad * itemsize + 4 * R_pad * 128 * mo,
    )

    partials = pl.pallas_call(
        kernel,
        out_shape=jax.ShapeDtypeStruct((R_pad, mo * 128), jnp.float32),
        grid=grid,
        in_specs=[
            pl.BlockSpec((tr, tm), lambda o, r, m: (r, o * mi + m)),
            pl.BlockSpec((tr, tm), lambda o, r, m: (r, o * mi + m)),
        ],
        out_specs=pl.BlockSpec((tr, 128), lambda o, r, m: (r, o)),
        compiler_params=pltpu.CompilerParams(
            dimension_semantics=("parallel", "parallel", "arbitrary"),
            vmem_limit_bytes=vmem_limit,
        ),
        cost_estimate=cost,
    )(p, t)

    # Tiny final reduction (size N*C) in plain XLA: lanes -> rows -> classes -> weighted means.
    row_sums = jnp.sum(partials, axis=1)[:R]                  # (N*C,)
    per_class_sum = jnp.sum(row_sums.reshape(N, C), axis=0)   # (C,)
    per_class_mean = per_class_sum / jnp.float32(N * M)       # mean over real N*H*W
    return jnp.sum(per_class_mean * weight.astype(jnp.float32))


def _reference(prey, target, weight):
    """Pure-JAX reference matching the PyTorch module."""
    p = prey.astype(jnp.float32)
    t = target.astype(jnp.float32)
    log_p = jnp.maximum(jnp.log(p), -100.0)
    log_1mp = jnp.maximum(jnp.log(1.0 - p), -100.0)
    bce = -(t * log_p + (1.0 - t) * log_1mp)
    per_class = jnp.mean(bce, axis=(0, 2, 3))  # mean over N, H, W
    return jnp.sum(per_class * weight)


if __name__ == "__main__":
    key = jax.random.PRNGKey(0)
    k1, k2 = jax.random.split(key)

    N, C, H, W = 2, 4, 16, 16
    weight = jnp.array([0.1, 0.2, 0.3, 0.4], dtype=jnp.float32)

    # predictions must lie in (0, 1) for BCE
    prey = jax.nn.sigmoid(jax.random.normal(k1, (N, C, H, W), dtype=jnp.float32))
    target = (jax.random.uniform(k2, (N, C, H, W)) > 0.5).astype(jnp.float32)

    loss = bce_loss_weight(prey, target, weight)
    loss = jax.block_until_ready(loss)

    ref = _reference(prey, target, weight)
    assert jnp.allclose(loss, ref, rtol=1e-5, atol=1e-5), (loss, ref)

    print("KERNEL_OK")
</pallas_src>

<mosaic_0001>
module attributes {stable_mosaic.version = 11 : i64} {
  func.func @_bce_kernel(%arg0: i32, %arg1: i32, %arg2: i32, %arg3: memref<8x256xf32, #tpu.memory_space<vmem>>, %arg4: memref<8x256xf32, #tpu.memory_space<vmem>>, %arg5: memref<8x128xf32, #tpu.memory_space<vmem>>) attributes {dimension_semantics = [#tpu.dimension_semantics<parallel>, #tpu.dimension_semantics<parallel>, #tpu.dimension_semantics<arbitrary>], iteration_bounds = array<i64: 1, 1, 1>, scalar_prefetch = 0 : i64, scratch_operands = 0 : i64, tpu.core_type = #tpu.core_type<tc>, window_params = [{transform_indices = @transform_0, window_bounds = array<i64: 8, 256>}, {transform_indices = @transform_1, window_bounds = array<i64: 8, 256>}, {transform_indices = @transform_2, window_bounds = array<i64: 8, 128>}]} {
    %c0_i32 = arith.constant 0 : i32
    %0 = arith.cmpi eq, %arg2, %c0_i32 : i32
    %1 = arith.extui %0 : i1 to i32
    %c0_i32_0 = arith.constant 0 : i32
    %2 = arith.cmpi ne, %1, %c0_i32_0 : i32
    scf.if %2 {
      %cst_18 = arith.constant 0.000000e+00 : f32
      %37 = vector.broadcast %cst_18 : f32 to vector<8x128xf32>
      %c0_19 = arith.constant 0 : index
      %c0_20 = arith.constant 0 : index
      %38 = vector.load %arg5[%c0_19, %c0_20] : memref<8x128xf32, #tpu.memory_space<vmem>>, vector<8x128xf32>
      tpu.vector_store %arg5[%c0_19, %c0_20], %37 {strides = array<i32>} : memref<8x128xf32, #tpu.memory_space<vmem>>, vector<8x128xf32>,
    } else {
    }
    %cst = arith.constant 0.000000e+00 : f32
    %3 = vector.broadcast %cst : f32 to vector<8x128xf32>
    %cst_1 = arith.constant 0.000000e+00 : f32
    %4 = vector.broadcast %cst_1 : f32 to vector<8x128xf32>
    %c0 = arith.constant 0 : index
    %c0_2 = arith.constant 0 : index
    %5 = vector.load %arg3[%c0, %c0_2] : memref<8x256xf32, #tpu.memory_space<vmem>>, vector<8x128xf32>
    %c0_3 = arith.constant 0 : index
    %c0_4 = arith.constant 0 : index
    %6 = vector.load %arg4[%c0_3, %c0_4] : memref<8x256xf32, #tpu.memory_space<vmem>>, vector<8x128xf32>
    %7 = math.log %5 : vector<8x128xf32>
    %cst_5 = arith.constant -1.000000e+02 : f32
    %8 = vector.broadcast %cst_5 : f32 to vector<8x128xf32>
    %9 = arith.maximumf %7, %8 : vector<8x128xf32>
    %cst_6 = arith.constant 1.000000e+00 : f32
    %10 = vector.broadcast %cst_6 : f32 to vector<8x128xf32>
    %11 = arith.subf %10, %5 : vector<8x128xf32>
    %12 = math.log %11 : vector<8x128xf32>
    %cst_7 = arith.constant -1.000000e+02 : f32
    %13 = vector.broadcast %cst_7 : f32 to vector<8x128xf32>
    %14 = arith.maximumf %12, %13 : vector<8x128xf32>
    %15 = arith.subf %14, %9 : vector<8x128xf32>
    %16 = arith.mulf %6, %15 : vector<8x128xf32>
    %17 = arith.subf %16, %14 : vector<8x128xf32>
    %18 = arith.addf %3, %17 : vector<8x128xf32>
    %c0_8 = arith.constant 0 : index
    %c128 = arith.constant 128 : index
    %19 = vector.load %arg3[%c0_8, %c128] : memref<8x256xf32, #tpu.memory_space<vmem>>, vector<8x128xf32>
    %c0_9 = arith.constant 0 : index
    %c128_10 = arith.constant 128 : index
    %20 = vector.load %arg4[%c0_9, %c128_10] : memref<8x256xf32, #tpu.memory_space<vmem>>, vector<8x128xf32>
    %21 = math.log %19 : vector<8x128xf32>
    %cst_11 = arith.constant -1.000000e+02 : f32
    %22 = vector.broadcast %cst_11 : f32 to vector<8x128xf32>
    %23 = arith.maximumf %21, %22 : vector<8x128xf32>
    %cst_12 = arith.constant 1.000000e+00 : f32
    %24 = vector.broadcast %cst_12 : f32 to vector<8x128xf32>
    %25 = arith.subf %24, %19 : vector<8x128xf32>
    %26 = math.log %25 : vector<8x128xf32>
    %cst_13 = arith.constant -1.000000e+02 : f32
    %27 = vector.broadcast %cst_13 : f32 to vector<8x128xf32>
    %28 = arith.maximumf %26, %27 : vector<8x128xf32>
    %29 = arith.subf %28, %23 : vector<8x128xf32>
    %30 = arith.mulf %20, %29 : vector<8x128xf32>
    %31 = arith.subf %30, %28 : vector<8x128xf32>
    %32 = arith.addf %4, %31 : vector<8x128xf32>
    %c0_14 = arith.constant 0 : index
    %c0_15 = arith.constant 0 : index
    %33 = vector.load %arg5[%c0_14, %c0_15] : memref<8x128xf32, #tpu.memory_space<vmem>>, vector<8x128xf32>
    %34 = arith.addf %18, %32 : vector<8x128xf32>
    %35 = arith.addf %33, %34 : vector<8x128xf32>
    %c0_16 = arith.constant 0 : index
    %c0_17 = arith.constant 0 : index
    %36 = vector.load %arg5[%c0_16, %c0_17] : memref<8x128xf32, #tpu.memory_space<vmem>>, vector<8x128xf32>
    tpu.vector_store %arg5[%c0_16, %c0_17], %35 {strides = array<i32>} : memref<8x128xf32, #tpu.memory_space<vmem>>, vector<8x128xf32>,
    return
  }
  func.func @transform_0(%arg0: i32, %arg1: i32, %arg2: i32) -> (i32, i32) {
    %c1_i32 = arith.constant 1 : i32
    %0 = arith.muli %arg0, %c1_i32 : i32
    %1 = arith.addi %0, %arg2 : i32
    %c0_i32 = arith.constant 0 : i32
    return %arg1, %1 : i32, i32
  }
  func.func @transform_1(%arg0: i32, %arg1: i32, %arg2: i32) -> (i32, i32) {
    %c1_i32 = arith.constant 1 : i32
    %0 = arith.muli %arg0, %c1_i32 : i32
    %1 = arith.addi %0, %arg2 : i32
    %c0_i32 = arith.constant 0 : i32
    return %arg1, %1 : i32, i32
  }
  func.func @transform_2(%arg0: i32, %arg1: i32, %arg2: i32) -> (i32, i32) {
    %c0_i32 = arith.constant 0 : i32
    return %arg1, %arg0 : i32, i32
  }
}

</mosaic_0001>

<llo_original>
// kernel: tpu_custom_call.1
$region0: #{tpu_custom_call.1}
  #allocation0 [shape = 'u32[]', space=smem, size = 0x4, offset = 0x4, fixed_abs, tag = 'smem constant byte address 0x4 - core index']
  #allocation1 [shape = 'u32[144,128]{1,0:T(1,128)}', space=vmem, size = 0x12000, scoped, tag = 'internal scratch']
  %s0 = inlined_call_operand.hbm [shape: f32[8,256], index: 0, kind: input, shape index: {}]
  %s1 = inlined_call_operand.hbm [shape: f32[8,256], index: 1, kind: input, shape index: {}]
  %s2 = inlined_call_operand.hbm [shape: f32[8,128], index: 2, kind: output, shape index: {}]
  %s3 = sld [smem:[#allocation0]]
  $region30: #{tpu_custom_call.1} parent=0
    _
  %s5 = ssub.s32 1, %s3
  %s6 = scalar_select 0, %s5, %s3
  $region1: #{tpu_custom_call.1} parent=0
    #allocation2 [shape = 'u8[8192]{0}', space=vmem, size = 0x2000, scoped, tag = 'input window, operand 0, single buffered']
    #allocation3 [shape = 's32[1]{0}', space=sflag, size = 0x4, scoped, tag = 'scoped memory for tpu_custom_call.1']
    #allocation4 [shape = 's32[1]{0}', space=sflag, size = 0x4, scoped, tag = 'scoped memory for tpu_custom_call.1']
    #allocation5 [shape = 'u8[8192]{0}', space=vmem, size = 0x2000, scoped, tag = 'input window, operand 1, single buffered']
    #allocation6 [shape = 's32[1]{0}', space=sflag, size = 0x4, scoped, tag = 'scoped memory for tpu_custom_call.1']
    #allocation7 [shape = 'u8[4096]{0}', space=vmem, size = 0x1000, scoped, tag = 'output window, operand 0, single buffered']
    %7 = vsyncpa [#allocation3], 0
    %8 = vsyncpa [#allocation6], 0
    %9 = vsyncpa [#allocation4], 0
    // Predicated region
    $region2: #{tpu_custom_call.1} parent=1 // pred_check
      _
    $region3: #{tpu_custom_call.1} parent=1 // pred_check_branch
      %11 = sbr.rel (0) target = $region5
    $region4: #{tpu_custom_call.1} parent=1 // pred_region
      %s12 = sadd.s32 0, 0
      %s13 = smul.u32 2, %s12
      %s15 = ssub.s32 256, 256
      %16 = vsyncadd [#allocation3], %s15
      %s17 = smul.addr %s13, 128
      %s18 = scalar_lea.hbm %s0, %s17
      %s20 = sshll.u32 [#allocation2], 4
      %s21 = int_to_ptr.vmem [resolvable:$true] %s20
      %23 = dma.hbm_to_vmem [thread:$0]  %s18, 256, %s21, [#allocation3]
    $region5: #{tpu_custom_call.1} parent=1 // pred_fallthru
      _
    // Predicated region
    $region6: #{tpu_custom_call.1} parent=1 // pred_check
      _
    $region7: #{tpu_custom_call.1} parent=1 // pred_check_branch
      %25 = sbr.rel (0) target = $region9
    $region8: #{tpu_custom_call.1} parent=1 // pred_region
      %s26 = sadd.s32 0, 0
      %s27 = smul.u32 2, %s26
      %s29 = ssub.s32 256, 256
      %30 = vsyncadd [#allocation6], %s29
      %s31 = smul.addr %s27, 128
      %s32 = scalar_lea.hbm %s1, %s31
      %s34 = sshll.u32 [#allocation5], 4
      %s35 = int_to_ptr.vmem [resolvable:$true] %s34
      %37 = dma.hbm_to_vmem [thread:$0]  %s32, 256, %s35, [#allocation6]
    $region9: #{tpu_custom_call.1} parent=1 // pred_fallthru
      _
    // Predicated region
    $region10: #{tpu_custom_call.1} parent=1 // pred_check
      _
    $region11: #{tpu_custom_call.1} parent=1 // pred_check_branch
      %39 = sbr.rel (0) target = $region13
    $region12: #{tpu_custom_call.1} parent=1 // pred_region
      %40 = dma.done [#allocation3], 256
    $region13: #{tpu_custom_call.1} parent=1 // pred_fallthru
      _
    // Predicated region
    $region14: #{tpu_custom_call.1} parent=1 // pred_check
      _
    $region15: #{tpu_custom_call.1} parent=1 // pred_check_branch
      %42 = sbr.rel (0) target = $region17
    $region16: #{tpu_custom_call.1} parent=1 // pred_region
      %43 = dma.done [#allocation6], 256
    $region17: #{tpu_custom_call.1} parent=1 // pred_fallthru
      _
    %s44 = sadd.s32 0, 0
    %s45 = smul.u32 2, %s44
    %s46 = sadd.s32 0, 0
    %s47 = smul.u32 2, %s46
    %p48 = scmp.eq.s32.totalorder 0, 0
    // Predicated region
    $region18: #{tpu_custom_call.1} parent=1 // pred_check
      %p49 = pneg %p48
    $region19: #{tpu_custom_call.1} parent=1 // pred_check_branch
      %51 = sbr.rel (%p49) target = $region21
    $region20: #{tpu_custom_call.1} parent=1 // pred_region
      %52 = vst [vmem:[#allocation7] sm:$0xff] 0.0
    $region21: #{tpu_custom_call.1} parent=1 // pred_fallthru
      _
    %v53 = vld [vmem:[#allocation2] sm:$0xff]
    %v54 = vld [vmem:[#allocation5] sm:$0xff]
    %v55 = vlog2.pop %v53
    %v56 = vmul.f32 %v55, 0.6931472
    %v57 = vmax.f32 %v56, -100.0
    %v58 = vsub.f32 1.0, %v53
    %v59 = vlog2.pop %v58
    %v60 = vmul.f32 %v59, 0.6931472
    %v61 = vmax.f32 %v60, -100.0
    %v62 = vsub.f32 %v61, %v57
    %v63 = vmul.f32 %v54, %v62
    %v64 = vsub.f32 %v63, %v61
    %v65 = vadd.f32 %v64, 0.0
    %v66 = vld [vmem:[#allocation2 + $0x8] sm:$0xff]
    %v67 = vld [vmem:[#allocation5 + $0x8] sm:$0xff]
    %v68 = vlog2.pop %v66
    %v69 = vmul.f32 %v68, 0.6931472
    %v70 = vmax.f32 %v69, -100.0
    %v71 = vsub.f32 1.0, %v66
    %v72 = vlog2.pop %v71
    %v73 = vmul.f32 %v72, 0.6931472
    %v74 = vmax.f32 %v73, -100.0
    %v75 = vsub.f32 %v74, %v70
    %v76 = vmul.f32 %v67, %v75
    %v77 = vsub.f32 %v76, %v74
    %v78 = vadd.f32 %v77, 0.0
    %v79 = vld [vmem:[#allocation7] sm:$0xff]
    %v80 = vadd.f32 %v65, %v78
    %v81 = vadd.f32 %v79, %v80
    %82 = vst [vmem:[#allocation7] sm:$0xff] %v81
    // Predicated region
    $region22: #{tpu_custom_call.1} parent=1 // pred_check
      _
    $region23: #{tpu_custom_call.1} parent=1 // pred_check_branch
      %84 = sbr.rel (0) target = $region25
    $region24: #{tpu_custom_call.1} parent=1 // pred_region
      %s86 = ssub.s32 128, 128
      %87 = vsyncadd [#allocation4], %s86
      %s89 = sshll.u32 [#allocation7], 4
      %s90 = int_to_ptr.vmem [resolvable:$true] %s89
      %92 = dma.vmem_to_hbm [thread:$0]  %s90, 128, %s2, [#allocation4]
    $region25: #{tpu_custom_call.1} parent=1 // pred_fallthru
      _
    // Predicated region
    $region26: #{tpu_custom_call.1} parent=1 // pred_check
      _
    $region27: #{tpu_custom_call.1} parent=1 // pred_check_branch
      %94 = sbr.rel (0) target = $region29
    $region28: #{tpu_custom_call.1} parent=1 // pred_region
      %95 = dma.done [#allocation4], 128
    $region29: #{tpu_custom_call.1} parent=1 // pred_fallthru
      _
    %96 = vsyncpa [#allocation3], 1
    %97 = vsyncpa [#allocation6], 1
    %98 = vsyncpa [#allocation4], 1

</llo_original>
